<compile_context>
chip_gen: v7x
topology: tpu7x:2x2x1
jax: 0.10.0
libtpu: 0.0.40
codegen_flags: <defaults>
</compile_context>

<pallas_src>
import jax
import jax.numpy as jnp
from jax.experimental import pallas as pl
from jax.experimental.pallas import tpu as pltpu


# ----------------------------------------------------------------------------
# Pallas kernel: one (TM, TN) output tile, reducing over the K grid axis.
# out = vis @ Wv + txt @ Wt + b  (== concat([vis, txt], -1) @ concat([Wv, Wt], 0) + b)
# ----------------------------------------------------------------------------
def _fusion_kernel(vis_ref, txt_ref, wv_ref, wt_ref, b_ref, o_ref, acc_ref):
    k = pl.program_id(2)

    @pl.when(k == 0)
    def _init():
        acc_ref[...] = jnp.zeros_like(acc_ref)

    acc_ref[...] += (
        jnp.dot(vis_ref[...], wv_ref[...], preferred_element_type=jnp.float32)
        + jnp.dot(txt_ref[...], wt_ref[...], preferred_element_type=jnp.float32)
    )

    @pl.when(k == pl.num_programs(2) - 1)
    def _finalize():
        # bias add once, in f32 on the accumulator, then cast for writeback.
        o_ref[...] = (acc_ref[...] + b_ref[...]).astype(o_ref.dtype)


def _round_up(x, m):
    return (x + m - 1) // m * m


def _pad2(x, rows, cols):
    pr, pc = rows - x.shape[0], cols - x.shape[1]
    if pr or pc:
        x = jnp.pad(x, ((0, pr), (0, pc)))
    return x


def fusion_forward(vis, txt, w_vis, w_txt, bias, *, out_dtype=None,
                   tm=256, tn=256, tk=512):
    """vis, txt: [B, S, H]; w_vis, w_txt: [H, H]; bias: [H] -> [B, S, H]."""
    B, S, H = vis.shape
    M, K, N = B * S, H, H
    out_dtype = out_dtype or vis.dtype

    # bf16 on the MXU (native on v5e/v6e/v7x), f32 accumulation in VMEM scratch.
    compute_dtype = jnp.bfloat16
    vis2 = vis.reshape(M, K).astype(compute_dtype)
    txt2 = txt.reshape(M, K).astype(compute_dtype)
    wv2 = w_vis.astype(compute_dtype)
    wt2 = w_txt.astype(compute_dtype)
    b2 = bias.reshape(1, N).astype(jnp.float32)

    # Tile sizes: lane dims multiples of 128, sublane multiples of 8; shrink to
    # the (rounded-up) problem size so tiny inputs don't over-allocate VMEM.
    # With bf16 tiles these stay well under the v7x 64 MiB VMEM budget even
    # with double-buffering (<= ~3 MiB total at the defaults).
    TM = min(tm, _round_up(M, 8))
    TN = min(tn, _round_up(N, 128))
    TK = min(tk, _round_up(K, 128))

    Mp, Kp, Np = _round_up(M, TM), _round_up(K, TK), _round_up(N, TN)

    vis2 = _pad2(vis2, Mp, Kp)
    txt2 = _pad2(txt2, Mp, Kp)
    wv2 = _pad2(wv2, Kp, Np)
    wt2 = _pad2(wt2, Kp, Np)
    b2 = _pad2(b2, 1, Np)

    grid = (Mp // TM, Np // TN, Kp // TK)

    out_itemsize = jnp.dtype(out_dtype).itemsize
    cost = pl.CostEstimate(
        flops=4 * Mp * Kp * Np,  # two M*K*N matmuls, 2 flops per MAC
        transcendentals=0,
        bytes_accessed=(2 * Mp * Kp + 2 * Kp * Np) * 2 + Np * 4
        + Mp * Np * out_itemsize,
    )

    out = pl.pallas_call(
        _fusion_kernel,
        out_shape=jax.ShapeDtypeStruct((Mp, Np), out_dtype),
        grid_spec=pltpu.PrefetchScalarGridSpec(
            num_scalar_prefetch=0,
            grid=grid,
            in_specs=[
                pl.BlockSpec((TM, TK), lambda i, j, k: (i, k)),  # vis
                pl.BlockSpec((TM, TK), lambda i, j, k: (i, k)),  # txt
                pl.BlockSpec((TK, TN), lambda i, j, k: (k, j)),  # w_vis
                pl.BlockSpec((TK, TN), lambda i, j, k: (k, j)),  # w_txt
                pl.BlockSpec((1, TN), lambda i, j, k: (0, j)),   # bias
            ],
            out_specs=pl.BlockSpec((TM, TN), lambda i, j, k: (i, j)),
            scratch_shapes=[pltpu.VMEM((TM, TN), jnp.float32)],
        ),
        compiler_params=pltpu.CompilerParams(
            dimension_semantics=("parallel", "parallel", "arbitrary"),
        ),
        cost_estimate=cost,
    )(vis2, txt2, wv2, wt2, b2)

    return out[:M, :N].reshape(B, S, N)


# ----------------------------------------------------------------------------
# Module mirrors
# ----------------------------------------------------------------------------
class Fusion:
    """Mirror of DocStruct Fusion: abstract, holds only config."""

    def __init__(self, config):
        self.config = config

    def forward(self, fusion_dict: dict):
        raise NotImplementedError


class ConcatLinearFusion(Fusion):
    """Synthetic concrete fusion: concat(visual, semantic) -> linear proj."""

    def __init__(self, config, key):
        super().__init__(config)
        H = config["hidden"]
        kv, kt, kb = jax.random.split(key, 3)
        # deterministic synthetic parameters (no checkpoint load)
        self.w_vis = jax.random.normal(kv, (H, H), jnp.float32) * 0.05
        self.w_txt = jax.random.normal(kt, (H, H), jnp.float32) * 0.05
        self.bias = jax.random.normal(kb, (H,), jnp.float32) * 0.01

    def forward(self, fusion_dict: dict):
        vis = fusion_dict["visual"]
        txt = fusion_dict["semantic"]
        return fusion_forward(vis, txt, self.w_vis, self.w_txt, self.bias)


def _bf16_reference(vis, txt, w_vis, w_txt, bias):
    """Plain-JAX reference at the kernel's precision (bf16 in, f32 acc)."""
    B, S, H = vis.shape
    v = vis.reshape(B * S, H).astype(jnp.bfloat16)
    t = txt.reshape(B * S, H).astype(jnp.bfloat16)
    ref = (
        jnp.dot(v, w_vis.astype(jnp.bfloat16), preferred_element_type=jnp.float32)
        + jnp.dot(t, w_txt.astype(jnp.bfloat16), preferred_element_type=jnp.float32)
        + bias.astype(jnp.float32)
    )
    return ref.reshape(B, S, H)


if __name__ == "__main__":
    key = jax.random.PRNGKey(0)
    k_vis, k_txt, k_param, k_vis2, k_txt2, k_param2 = jax.random.split(key, 6)

    # --- abstract base behaves like the PyTorch reference ---------------------
    base = Fusion({"hidden": 128})
    try:
        base.forward({"visual": None, "semantic": None})
        raise RuntimeError("base Fusion.forward should be abstract")
    except NotImplementedError:
        pass

    # --- main check: small but lane-aligned shape (H multiple of 128) ---------
    B, S, H = 2, 8, 128
    config = {"hidden": H}
    vis = jax.random.normal(k_vis, (B, S, H), jnp.float32)
    txt = jax.random.normal(k_txt, (B, S, H), jnp.float32)

    model = ConcatLinearFusion(config, k_param)
    out = jax.block_until_ready(model.forward({"visual": vis, "semantic": txt}))

    ref = _bf16_reference(vis, txt, model.w_vis, model.w_txt, model.bias)
    assert out.shape == (B, S, H)
    assert jnp.allclose(out, ref, atol=1e-2, rtol=1e-2)

    # --- secondary check: unaligned H exercises the zero-padding path ---------
    B2, S2, H2 = 2, 8, 32
    vis_s = jax.random.normal(k_vis2, (B2, S2, H2), jnp.float32)
    txt_s = jax.random.normal(k_txt2, (B2, S2, H2), jnp.float32)
    model_s = ConcatLinearFusion({"hidden": H2}, k_param2)
    out_s = jax.block_until_ready(
        model_s.forward({"visual": vis_s, "semantic": txt_s}))
    ref_s = _bf16_reference(vis_s, txt_s, model_s.w_vis, model_s.w_txt,
                            model_s.bias)
    assert out_s.shape == (B2, S2, H2)
    assert jnp.allclose(out_s, ref_s, atol=1e-2, rtol=1e-2)

    print("KERNEL_OK")
</pallas_src>

<mosaic_0001>
module attributes {stable_mosaic.version = 11 : i64} {
  func.func @_fusion_kernel(%arg0: i32, %arg1: i32, %arg2: i32, %arg3: memref<16x128xbf16, #tpu.memory_space<vmem>>, %arg4: memref<16x128xbf16, #tpu.memory_space<vmem>>, %arg5: memref<128x128xbf16, #tpu.memory_space<vmem>>, %arg6: memref<128x128xbf16, #tpu.memory_space<vmem>>, %arg7: memref<1x128xf32, #tpu.memory_space<vmem>>, %arg8: memref<16x128xf32, #tpu.memory_space<vmem>>, %arg9: memref<16x128xf32, #tpu.memory_space<vmem>>) attributes {dimension_semantics = [#tpu.dimension_semantics<parallel>, #tpu.dimension_semantics<parallel>, #tpu.dimension_semantics<arbitrary>], iteration_bounds = array<i64: 1, 1, 1>, scalar_prefetch = 0 : i64, scratch_operands = 1 : i64, tpu.core_type = #tpu.core_type<tc>, window_params = [{transform_indices = @transform_0, window_bounds = array<i64: 16, 128>}, {transform_indices = @transform_1, window_bounds = array<i64: 16, 128>}, {transform_indices = @transform_2, window_bounds = array<i64: 128, 128>}, {transform_indices = @transform_3, window_bounds = array<i64: 128, 128>}, {transform_indices = @transform_4, window_bounds = array<i64: 1, 128>}, {transform_indices = @transform_5, window_bounds = array<i64: 16, 128>}]} {
    %c0_i32 = arith.constant 0 : i32
    %0 = arith.cmpi eq, %arg2, %c0_i32 : i32
    %1 = arith.extui %0 : i1 to i32
    %c0_i32_0 = arith.constant 0 : i32
    %2 = arith.cmpi ne, %1, %c0_i32_0 : i32
    scf.if %2 {
      %cst_15 = arith.constant 0.000000e+00 : f32
      %16 = vector.broadcast %cst_15 : f32 to vector<16x128xf32>
      %c0_16 = arith.constant 0 : index
      %c0_17 = arith.constant 0 : index
      %17 = vector.load %arg9[%c0_16, %c0_17] : memref<16x128xf32, #tpu.memory_space<vmem>>, vector<16x128xf32>
      tpu.vector_store %arg9[%c0_16, %c0_17], %16 {strides = array<i32>} : memref<16x128xf32, #tpu.memory_space<vmem>>, vector<16x128xf32>,
    } else {
    }
    %c0 = arith.constant 0 : index
    %c0_1 = arith.constant 0 : index
    %3 = vector.load %arg9[%c0, %c0_1] : memref<16x128xf32, #tpu.memory_space<vmem>>, vector<16x128xf32>
    %c0_2 = arith.constant 0 : index
    %c0_3 = arith.constant 0 : index
    %4 = vector.load %arg3[%c0_2, %c0_3] : memref<16x128xbf16, #tpu.memory_space<vmem>>, vector<16x128xbf16>
    %c0_4 = arith.constant 0 : index
    %c0_5 = arith.constant 0 : index
    %5 = vector.load %arg5[%c0_4, %c0_5] : memref<128x128xbf16, #tpu.memory_space<vmem>>, vector<128x128xbf16>
    %cst = arith.constant dense<0.000000e+00> : vector<16x128xf32>
    %6 = tpu.matmul %4, %5, %cst {dimension_numbers = #tpu.dot_dimension_numbers<[1], [0], [0], [1], [0, 0, 1, 1], [], []>} : vector<16x128xbf16>, vector<128x128xbf16>, vector<16x128xf32> -> vector<16x128xf32>
    %c0_6 = arith.constant 0 : index
    %c0_7 = arith.constant 0 : index
    %7 = vector.load %arg4[%c0_6, %c0_7] : memref<16x128xbf16, #tpu.memory_space<vmem>>, vector<16x128xbf16>
    %c0_8 = arith.constant 0 : index
    %c0_9 = arith.constant 0 : index
    %8 = vector.load %arg6[%c0_8, %c0_9] : memref<128x128xbf16, #tpu.memory_space<vmem>>, vector<128x128xbf16>
    %cst_10 = arith.constant dense<0.000000e+00> : vector<16x128xf32>
    %9 = tpu.matmul %7, %8, %cst_10 {dimension_numbers = #tpu.dot_dimension_numbers<[1], [0], [0], [1], [0, 0, 1, 1], [], []>} : vector<16x128xbf16>, vector<128x128xbf16>, vector<16x128xf32> -> vector<16x128xf32>
    %10 = arith.addf %6, %9 : vector<16x128xf32>
    %11 = arith.addf %3, %10 : vector<16x128xf32>
    %c0_11 = arith.constant 0 : index
    %c0_12 = arith.constant 0 : index
    %12 = vector.load %arg9[%c0_11, %c0_12] : memref<16x128xf32, #tpu.memory_space<vmem>>, vector<16x128xf32>
    tpu.vector_store %arg9[%c0_11, %c0_12], %11 {strides = array<i32>} : memref<16x128xf32, #tpu.memory_space<vmem>>, vector<16x128xf32>,
    %c0_i32_13 = arith.constant 0 : i32
    %13 = arith.cmpi eq, %arg2, %c0_i32_13 : i32
    %14 = arith.extui %13 : i1 to i32
    %c0_i32_14 = arith.constant 0 : i32
    %15 = arith.cmpi ne, %14, %c0_i32_14 : i32
    scf.if %15 {
      %c0_15 = arith.constant 0 : index
      %c0_16 = arith.constant 0 : index
      %16 = vector.load %arg9[%c0_15, %c0_16] : memref<16x128xf32, #tpu.memory_space<vmem>>, vector<16x128xf32>
      %c0_17 = arith.constant 0 : index
      %c0_18 = arith.constant 0 : index
      %17 = vector.load %arg7[%c0_17, %c0_18] : memref<1x128xf32, #tpu.memory_space<vmem>>, vector<1x128xf32>
      %18 = vector.broadcast %17 : vector<1x128xf32> to vector<16x128xf32>
      %19 = arith.addf %16, %18 : vector<16x128xf32>
      %c0_19 = arith.constant 0 : index
      %c0_20 = arith.constant 0 : index
      %20 = vector.load %arg8[%c0_19, %c0_20] : memref<16x128xf32, #tpu.memory_space<vmem>>, vector<16x128xf32>
      tpu.vector_store %arg8[%c0_19, %c0_20], %19 {strides = array<i32>} : memref<16x128xf32, #tpu.memory_space<vmem>>, vector<16x128xf32>,
    } else {
    }
    return
  }
  func.func @transform_0(%arg0: i32, %arg1: i32, %arg2: i32) -> (i32, i32) {
    %c0_i32 = arith.constant 0 : i32
    return %arg0, %arg2 : i32, i32
  }
  func.func @transform_1(%arg0: i32, %arg1: i32, %arg2: i32) -> (i32, i32) {
    %c0_i32 = arith.constant 0 : i32
    return %arg0, %arg2 : i32, i32
  }
  func.func @transform_2(%arg0: i32, %arg1: i32, %arg2: i32) -> (i32, i32) {
    %c0_i32 = arith.constant 0 : i32
    return %arg2, %arg1 : i32, i32
  }
  func.func @transform_3(%arg0: i32, %arg1: i32, %arg2: i32) -> (i32, i32) {
    %c0_i32 = arith.constant 0 : i32
    return %arg2, %arg1 : i32, i32
  }
  func.func @transform_4(%arg0: i32, %arg1: i32, %arg2: i32) -> (i32, i32) {
    %c0_i32 = arith.constant 0 : i32
    %c0_i32_0 = arith.constant 0 : i32
    return %c0_i32, %arg1 : i32, i32
  }
  func.func @transform_5(%arg0: i32, %arg1: i32, %arg2: i32) -> (i32, i32) {
    %c0_i32 = arith.constant 0 : i32
    return %arg0, %arg1 : i32, i32
  }
}

</mosaic_0001>

<llo_original>
// kernel: tpu_custom_call.1
$region0: #{tpu_custom_call.1}
  #allocation0 [shape = 'u32[]', space=smem, size = 0x4, offset = 0x4, fixed_abs, tag = 'smem constant byte address 0x4 - core index']
  #allocation1 [shape = 'u32[144,128]{1,0:T(1,128)}', space=vmem, size = 0x12000, scoped, tag = 'internal scratch']
  #allocation2 [shape = 'f32[16,128]{1,0:T(8,128)}', space=vmem, size = 0x2000, scoped, tag = 'scratch operand']
  %s0 = inlined_call_operand.hbm [shape: bf16[16,128], index: 0, kind: input, shape index: {}]
  %s1 = inlined_call_operand.hbm [shape: bf16[16,128], index: 1, kind: input, shape index: {}]
  %s2 = inlined_call_operand.hbm [shape: bf16[128,128], index: 2, kind: input, shape index: {}]
  %s3 = inlined_call_operand.hbm [shape: bf16[128,128], index: 3, kind: input, shape index: {}]
  %s4 = inlined_call_operand.vmem [shape: f32[1,128], index: 4, kind: input, shape index: {}]
  %s5 = inlined_call_operand.hbm [shape: f32[16,128], index: 5, kind: output, shape index: {}]
  %s6 = sld [smem:[#allocation0]]
  $region54: #{tpu_custom_call.1} parent=0
    _
  %s8 = ssub.s32 1, %s6
  %s9 = scalar_select 0, %s8, %s6
  $region1: #{tpu_custom_call.1} parent=0
    #allocation3 [shape = 'u8[4096]{0}', space=vmem, size = 0x1000, scoped, tag = 'input window, operand 0, single buffered']
    #allocation4 [shape = 's32[1]{0}', space=sflag, size = 0x4, scoped, tag = 'scoped memory for tpu_custom_call.1']
    #allocation5 [shape = 's32[1]{0}', space=sflag, size = 0x4, scoped, tag = 'scoped memory for tpu_custom_call.1']
    #allocation6 [shape = 'u8[4096]{0}', space=vmem, size = 0x1000, scoped, tag = 'input window, operand 1, single buffered']
    #allocation7 [shape = 's32[1]{0}', space=sflag, size = 0x4, scoped, tag = 'scoped memory for tpu_custom_call.1']
    #allocation8 [shape = 'u8[32768]{0}', space=vmem, size = 0x8000, scoped, tag = 'input window, operand 2, single buffered']
    #allocation9 [shape = 'u8[32768]{0}', space=vmem, size = 0x8000, scoped, tag = 'input window, operand 3, single buffered']
    #allocation10 [shape = 's32[1]{0}', space=sflag, size = 0x4, scoped, tag = 'scoped memory for tpu_custom_call.1']
    #allocation11 [shape = 'u8[8192]{0}', space=vmem, size = 0x2000, scoped, tag = 'output window, operand 0, single buffered']
    %10 = vsyncpa [#allocation4], 0
    %11 = vsyncpa [#allocation7], 0
    %12 = vsyncpa [#allocation10], 0
    %13 = vsyncpa [#allocation5], 0
    // Predicated region
    $region2: #{tpu_custom_call.1} parent=1 // pred_check
      _
    $region3: #{tpu_custom_call.1} parent=1 // pred_check_branch
      %15 = sbr.rel (0) target = $region5
    $region4: #{tpu_custom_call.1} parent=1 // pred_region
      %s17 = ssub.s32 128, 128
      %18 = vsyncadd [#allocation4], %s17
      %s19 = sshll.u32 [#allocation3], 4
      %s20 = int_to_ptr.vmem [resolvable:$true] %s19
      %25 = dma.hbm_to_vmem [thread:$0]  %s0, 128, %s20, [#allocation4], 64, 64, 4
    $region5: #{tpu_custom_call.1} parent=1 // pred_fallthru
      _
    // Predicated region
    $region6: #{tpu_custom_call.1} parent=1 // pred_check
      _
    $region7: #{tpu_custom_call.1} parent=1 // pred_check_branch
      %27 = sbr.rel (0) target = $region9
    $region8: #{tpu_custom_call.1} parent=1 // pred_region
      %s29 = ssub.s32 128, 128
      %30 = vsyncadd [#allocation7], %s29
      %s31 = sshll.u32 [#allocation6], 4
      %s32 = int_to_ptr.vmem [resolvable:$true] %s31
      %37 = dma.hbm_to_vmem [thread:$0]  %s1, 128, %s32, [#allocation7], 64, 64, 4
    $region9: #{tpu_custom_call.1} parent=1 // pred_fallthru
      _
    // Predicated region
    $region10: #{tpu_custom_call.1} parent=1 // pred_check
      _
    $region11: #{tpu_custom_call.1} parent=1 // pred_check_branch
      %39 = sbr.rel (0) target = $region13
    $region12: #{tpu_custom_call.1} parent=1 // pred_region
      %s41 = ssub.s32 1024, 1024
      %42 = vsyncadd [#allocation7], %s41
      %s43 = sshll.u32 [#allocation8], 4
      %s44 = int_to_ptr.vmem [resolvable:$true] %s43
      %49 = dma.hbm_to_vmem [thread:$0]  %s2, 1024, %s44, [#allocation7], 64, 64, 4
    $region13: #{tpu_custom_call.1} parent=1 // pred_fallthru
      _
    // Predicated region
    $region14: #{tpu_custom_call.1} parent=1 // pred_check
      _
    $region15: #{tpu_custom_call.1} parent=1 // pred_check_branch
      %51 = sbr.rel (0) target = $region17
    $region16: #{tpu_custom_call.1} parent=1 // pred_region
      %s53 = ssub.s32 1024, 1024
      %54 = vsyncadd [#allocation10], %s53
      %s55 = sshll.u32 [#allocation9], 4
      %s56 = int_to_ptr.vmem [resolvable:$true] %s55
      %61 = dma.hbm_to_vmem [thread:$0]  %s3, 1024, %s56, [#allocation10], 64, 64, 4
    $region17: #{tpu_custom_call.1} parent=1 // pred_fallthru
      _
    // Predicated region
    $region18: #{tpu_custom_call.1} parent=1 // pred_check
      _
    $region19: #{tpu_custom_call.1} parent=1 // pred_check_branch
      %63 = sbr.rel (0) target = $region21
    $region20: #{tpu_custom_call.1} parent=1 // pred_region
      _
    $region21: #{tpu_custom_call.1} parent=1 // pred_fallthru
      _
    // Predicated region
    $region22: #{tpu_custom_call.1} parent=1 // pred_check
      _
    $region23: #{tpu_custom_call.1} parent=1 // pred_check_branch
      %65 = sbr.rel (0) target = $region25
    $region24: #{tpu_custom_call.1} parent=1 // pred_region
      %66 = dma.done [#allocation4], 128
    $region25: #{tpu_custom_call.1} parent=1 // pred_fallthru
      _
    // Predicated region
    $region26: #{tpu_custom_call.1} parent=1 // pred_check
      _
    $region27: #{tpu_custom_call.1} parent=1 // pred_check_branch
      %68 = sbr.rel (0) target = $region29
    $region28: #{tpu_custom_call.1} parent=1 // pred_region
      %69 = dma.done [#allocation7], 128
    $region29: #{tpu_custom_call.1} parent=1 // pred_fallthru
      _
    // Predicated region
    $region30: #{tpu_custom_call.1} parent=1 // pred_check
      _
    $region31: #{tpu_custom_call.1} parent=1 // pred_check_branch
      %71 = sbr.rel (0) target = $region33
    $region32: #{tpu_custom_call.1} parent=1 // pred_region
      %72 = dma.done [#allocation7], 1024
    $region33: #{tpu_custom_call.1} parent=1 // pred_fallthru
      _
    // Predicated region
    $region34: #{tpu_custom_call.1} parent=1 // pred_check
      _
    $region35: #{tpu_custom_call.1} parent=1 // pred_check_branch
      %74 = sbr.rel (0) target = $region37
    $region36: #{tpu_custom_call.1} parent=1 // pred_region
      %75 = dma.done [#allocation10], 1024
    $region37: #{tpu_custom_call.1} parent=1 // pred_fallthru
      _
    %p77 = scmp.eq.s32.totalorder 0, 0
    // Predicated region
    $region38: #{tpu_custom_call.1} parent=1 // pred_check
      %p78 = pneg %p77
    $region39: #{tpu_custom_call.1} parent=1 // pred_check_branch
      %80 = sbr.rel (%p78) target = $region41
    $region40: #{tpu_custom_call.1} parent=1 // pred_region
      %81 = vst [vmem:[#allocation2] sm:$0xff] 0.0
      %82 = vst [vmem:[#allocation2 + $0x8] sm:$0xff] 0.0
    $region41: #{tpu_custom_call.1} parent=1 // pred_fallthru
      _
    %v83 = vld [vmem:[#allocation2] sm:$0xff]
    %v84 = vld [vmem:[#allocation2 + $0x8] sm:$0xff]
    %v85 = vld [vmem:[#allocation3] sm:$0xf]
    %v86 = vld [vmem:[#allocation3 + $0x4] sm:$0xf]
    %v87 = vld [vmem:[#allocation8] sm:$0xf]
    %v88 = vld [vmem:[#allocation8 + $0x4] sm:$0xf]
    %v89 = vld [vmem:[#allocation8 + $0x8] sm:$0xf]
    %v90 = vld [vmem:[#allocation8 + $0xc] sm:$0xf]
    %v91 = vld [vmem:[#allocation8 + $0x10] sm:$0xf]
    %v92 = vld [vmem:[#allocation8 + $0x14] sm:$0xf]
    %v93 = vld [vmem:[#allocation8 + $0x18] sm:$0xf]
    %v94 = vld [vmem:[#allocation8 + $0x1c] sm:$0xf]
    %v95 = vld [vmem:[#allocation8 + $0x20] sm:$0xf]
    %v96 = vld [vmem:[#allocation8 + $0x24] sm:$0xf]
    %v97 = vld [vmem:[#allocation8 + $0x28] sm:$0xf]
    %v98 = vld [vmem:[#allocation8 + $0x2c] sm:$0xf]
    %v99 = vld [vmem:[#allocation8 + $0x30] sm:$0xf]
    %v100 = vld [vmem:[#allocation8 + $0x34] sm:$0xf]
    %v101 = vld [vmem:[#allocation8 + $0x38] sm:$0xf]
    %v102 = vld [vmem:[#allocation8 + $0x3c] sm:$0xf]
    %v103 = vld [vmem:[#allocation6] sm:$0xf]
    %v104 = vld [vmem:[#allocation6 + $0x4] sm:$0xf]
    %v105 = vld [vmem:[#allocation9] sm:$0xf]
    %v106 = vld [vmem:[#allocation9 + $0x4] sm:$0xf]
    %v107 = vld [vmem:[#allocation9 + $0x8] sm:$0xf]
    %v108 = vld [vmem:[#allocation9 + $0xc] sm:$0xf]
    %v109 = vld [vmem:[#allocation9 + $0x10] sm:$0xf]
    %v110 = vld [vmem:[#allocation9 + $0x14] sm:$0xf]
    %v111 = vld [vmem:[#allocation9 + $0x18] sm:$0xf]
    %v112 = vld [vmem:[#allocation9 + $0x1c] sm:$0xf]
    %v113 = vld [vmem:[#allocation9 + $0x20] sm:$0xf]
    %v114 = vld [vmem:[#allocation9 + $0x24] sm:$0xf]
    %v115 = vld [vmem:[#allocation9 + $0x28] sm:$0xf]
    %v116 = vld [vmem:[#allocation9 + $0x2c] sm:$0xf]
    %v117 = vld [vmem:[#allocation9 + $0x30] sm:$0xf]
    %v118 = vld [vmem:[#allocation9 + $0x34] sm:$0xf]
    %v119 = vld [vmem:[#allocation9 + $0x38] sm:$0xf]
    %v120 = vld [vmem:[#allocation9 + $0x3c] sm:$0xf]
    %v123 = vunpack.c.l.b16 %v103
    %v124 = vunpack.c.l.b16 %v104
    %v125 = vpack.c.b16 %v124, %v123
    %v143 = vunpack.c.l.b16 %v105
    %v144 = vunpack.c.l.b16 %v106
    %v145 = vunpack.c.l.b16 %v107
    %v146 = vunpack.c.l.b16 %v108
    %v147 = vunpack.c.l.b16 %v109
    %v148 = vunpack.c.l.b16 %v110
    %v149 = vunpack.c.l.b16 %v111
    %v150 = vunpack.c.l.b16 %v112
    %v151 = vunpack.c.l.b16 %v113
    %v152 = vunpack.c.l.b16 %v114
    %v153 = vunpack.c.l.b16 %v115
    %v154 = vunpack.c.l.b16 %v116
    %v155 = vunpack.c.l.b16 %v117
    %v156 = vunpack.c.l.b16 %v118
    %v157 = vunpack.c.l.b16 %v119
    %v158 = vunpack.c.l.b16 %v120
    %v159 = vpack.c.b16 %v144, %v143
    %v160 = vpack.c.b16 %v146, %v145
    %v161 = vpack.c.b16 %v148, %v147
    %v162 = vpack.c.b16 %v150, %v149
    %v163 = vpack.c.b16 %v152, %v151
    %v164 = vpack.c.b16 %v154, %v153
    %v165 = vpack.c.b16 %v156, %v155
    %v166 = vpack.c.b16 %v158, %v157
    %175 = vmatprep.subr.bf16.mxu0 0
    %176 = vmatpush1.bf16.msra.mxu0 %v159
    %177 = vmatprep.subr.bf16.mxu0 0
    %178 = vmatpush1.bf16.msra.mxu0 %v160
    %179 = vmatprep.subr.bf16.mxu0 0
    %180 = vmatpush1.bf16.msra.mxu0 %v161
    %181 = vmatprep.subr.bf16.mxu0 0
    %182 = vmatpush1.bf16.msra.mxu0 %v162
    %183 = vmatprep.subr.bf16.mxu0 0
    %184 = vmatpush1.bf16.msra.mxu0 %v163
    %185 = vmatprep.subr.bf16.mxu0 0
    %186 = vmatpush1.bf16.msra.mxu0 %v164
    %187 = vmatprep.subr.bf16.mxu0 0
    %188 = vmatpush1.bf16.msra.mxu0 %v165
    %189 = vmatprep.subr.bf16.mxu0 0
    %190 = vmatpush1.bf16.msra.mxu0 %v166
    %191 = vmatprep.subr.bf16.mxu0 0
    %192 = vmatpush1.bf16.msra.mxu0 0
    %193 = vmatprep.subr.bf16.mxu0 0
    %194 = vmatpush1.bf16.msra.mxu0 0
    %195 = vmatprep.subr.bf16.mxu0 0
    %196 = vmatpush1.bf16.msra.mxu0 0
    %197 = vmatprep.subr.bf16.mxu0 0
    %198 = vmatpush1.bf16.msra.mxu0 0
    %199 = vmatprep.subr.bf16.mxu0 0
    %200 = vmatpush1.bf16.msra.mxu0 0
    %201 = vmatprep.subr.bf16.mxu0 0
    %202 = vmatpush1.bf16.msra.mxu0 0
    %203 = vmatprep.subr.bf16.mxu0 0
    %204 = vmatpush1.bf16.msra.mxu0 0
    %205 = vmatprep.subr.bf16.mxu0 0
    %206 = vmatpush1.bf16.msra.mxu0 0
    %207 = vmatprep.mubr.bf16.mxu0 0
    %208 = vmatmul.mubr.bf16.gmra.mrb[0].mxu0 %v125
    %v209 = vpop.f32.mrb[0].mxu0
    %v210 = vadd.f32 0.0, %v209
    %v211 = vpop.f32.mrb[0].mxu0
    %v212 = vpop.f32.mrb[0].mxu0
    %v213 = vadd.f32 0.0, %v212
    %v214 = vpop.f32.mrb[0].mxu0
    %215 = vdwg.mxu0
    %v218 = vunpack.c.l.b16 %v85
    %v219 = vunpack.c.l.b16 %v86
    %v220 = vpack.c.b16 %v219, %v218
    %v238 = vunpack.c.l.b16 %v87
    %v239 = vunpack.c.l.b16 %v88
    %v240 = vunpack.c.l.b16 %v89
    %v241 = vunpack.c.l.b16 %v90
    %v242 = vunpack.c.l.b16 %v91
    %v243 = vunpack.c.l.b16 %v92
    %v244 = vunpack.c.l.b16 %v93
    %v245 = vunpack.c.l.b16 %v94
    %v246 = vunpack.c.l.b16 %v95
    %v247 = vunpack.c.l.b16 %v96
    %v248 = vunpack.c.l.b16 %v97
    %v249 = vunpack.c.l.b16 %v98
    %v250 = vunpack.c.l.b16 %v99
    %v251 = vunpack.c.l.b16 %v100
    %v252 = vunpack.c.l.b16 %v101
    %v253 = vunpack.c.l.b16 %v102
    %v254 = vpack.c.b16 %v239, %v238
    %v255 = vpack.c.b16 %v241, %v240
    %v256 = vpack.c.b16 %v243, %v242
    %v257 = vpack.c.b16 %v245, %v244
    %v258 = vpack.c.b16 %v247, %v246
    %v259 = vpack.c.b16 %v249, %v248
    %v260 = vpack.c.b16 %v251, %v250
    %v261 = vpack.c.b16 %v253, %v252
    %270 = vmatprep.subr.bf16.mxu0 0
    %271 = vmatpush1.bf16.msra.mxu0 %v254
    %272 = vmatprep.subr.bf16.mxu0 0
    %273 = vmatpush1.bf16.msra.mxu0 %v255
    %274 = vmatprep.subr.bf16.mxu0 0
    %275 = vmatpush1.bf16.msra.mxu0 %v256
    %276 = vmatprep.subr.bf16.mxu0 0
    %277 = vmatpush1.bf16.msra.mxu0 %v257
    %278 = vmatprep.subr.bf16.mxu0 0
    %279 = vmatpush1.bf16.msra.mxu0 %v258
    %280 = vmatprep.subr.bf16.mxu0 0
    %281 = vmatpush1.bf16.msra.mxu0 %v259
    %282 = vmatprep.subr.bf16.mxu0 0
    %283 = vmatpush1.bf16.msra.mxu0 %v260
    %284 = vmatprep.subr.bf16.mxu0 0
    %285 = vmatpush1.bf16.msra.mxu0 %v261
    %286 = vmatprep.subr.bf16.mxu0 0
    %287 = vmatpush1.bf16.msra.mxu0 0
    %288 = vmatprep.subr.bf16.mxu0 0
    %289 = vmatpush1.bf16.msra.mxu0 0
    %290 = vmatprep.subr.bf16.mxu0 0
    %291 = vmatpush1.bf16.msra.mxu0 0
    %292 = vmatprep.subr.bf16.mxu0 0
    %293 = vmatpush1.bf16.msra.mxu0 0
    %294 = vmatprep.subr.bf16.mxu0 0
    %295 = vmatpush1.bf16.msra.mxu0 0
    %296 = vmatprep.subr.bf16.mxu0 0
    %297 = vmatpush1.bf16.msra.mxu0 0
    %298 = vmatprep.subr.bf16.mxu0 0
    %299 = vmatpush1.bf16.msra.mxu0 0
    %300 = vmatprep.subr.bf16.mxu0 0
    %301 = vmatpush1.bf16.msra.mxu0 0
    %302 = vmatprep.mubr.bf16.mxu0 0
    %303 = vmatmul.mubr.bf16.gmra.mrb[0].mxu0 %v220
    %v304 = vpop.f32.mrb[0].mxu0
    %v305 = vadd.f32 %v210, %v304
    %v306 = vpop.f32.mrb[0].mxu0
    %v307 = vpop.f32.mrb[0].mxu0
    %v308 = vadd.f32 %v213, %v307
    %v309 = vpop.f32.mrb[0].mxu0
    %310 = vdwg.mxu0
    %v311 = vadd.f32 %v83, %v305
    %v312 = vadd.f32 %v84, %v308
    %313 = vst [vmem:[#allocation2] sm:$0xff] %v311
    %314 = vst [vmem:[#allocation2 + $0x8] sm:$0xff] %v312
    // Predicated region
    $region42: #{tpu_custom_call.1} parent=1 // pred_check
      %p315 = pneg %p77
    $region43: #{tpu_custom_call.1} parent=1 // pred_check_branch
      %317 = sbr.rel (%p315) target = $region45
    $region44: #{tpu_custom_call.1} parent=1 // pred_region
      %v318 = vld [vmem:[#allocation2] sm:$0xff]
      %v319 = vld [vmem:[#allocation2 + $0x8] sm:$0xff]
      %v320 = vld [vmem:[%s4] sm:$0x1]
      %v322 = vlaneseq
      %v323 = vshrl.u32 %v322, 7
      %v324 = vsub.s32 0, %v323
      %v325 = vrot.slane %v320, %v324
      %v327 = vadd.f32 %v318, %v325
      %v328 = vadd.f32 %v319, %v325
      %329 = vst [vmem:[#allocation11] sm:$0xff] %v327
      %330 = vst [vmem:[#allocation11 + $0x8] sm:$0xff] %v328
    $region45: #{tpu_custom_call.1} parent=1 // pred_fallthru
      _
    // Predicated region
    $region46: #{tpu_custom_call.1} parent=1 // pred_check
      _
    $region47: #{tpu_custom_call.1} parent=1 // pred_check_branch
      %332 = sbr.rel (0) target = $region49
    $region48: #{tpu_custom_call.1} parent=1 // pred_region
      %s334 = ssub.s32 256, 256
      %335 = vsyncadd [#allocation5], %s334
      %s336 = sshll.u32 [#allocation11], 4
      %s337 = int_to_ptr.vmem [resolvable:$true] %s336
      %342 = dma.vmem_to_hbm [thread:$0]  %s337, 256, %s5, [#allocation5], 128, 128, 8
    $region49: #{tpu_custom_call.1} parent=1 // pred_fallthru
      _
    // Predicated region
    $region50: #{tpu_custom_call.1} parent=1 // pred_check
      _
    $region51: #{tpu_custom_call.1} parent=1 // pred_check_branch
      %344 = sbr.rel (0) target = $region53
    $region52: #{tpu_custom_call.1} parent=1 // pred_region
      %345 = dma.done [#allocation5], 256
    $region53: #{tpu_custom_call.1} parent=1 // pred_fallthru
      _
    %346 = vsyncpa [#allocation4], 1
    %347 = vsyncpa [#allocation7], 1
    %348 = vsyncpa [#allocation10], 1
    %349 = vsyncpa [#allocation5], 1

</llo_original>
